<compile_context>
chip_gen: v6e
topology: v6e:2x2x1
jax: 0.10.0
libtpu: 0.0.40
codegen_flags: <defaults>
</compile_context>

<pallas_src>
import math

import jax
import jax.numpy as jnp
from jax.experimental import pallas as pl
from jax.experimental.pallas import tpu as pltpu


def _hgl_kernel(x_ref, mean_ref, isig_ref, logz_ref, val_ref, idx_ref):
    # x_ref:    (dim, block_n)   samples on the lane axis (VMEM)
    # mean_ref: (units, dim, 1)  VMEM
    # isig_ref: (units, dim, 1)  VMEM, 1/|sigma|
    # logz_ref: (units,)         SMEM, per-unit log-normalizer
    # val_ref:  (1, block_n)     f32   max_u prod_d pdf
    # idx_ref:  (1, block_n)     int32 argmax_u (first max on ties)
    x = x_ref[...]                                        # (dim, block_n) f32
    units = mean_ref.shape[0]

    best_lp = None
    best_idx = None
    for u in range(units):                                # static unroll (units is tiny)
        z = (x - mean_ref[u]) * isig_ref[u]               # (dim, block_n), VALU only
        lp = logz_ref[u] - 0.5 * jnp.sum(z * z, axis=0, keepdims=True)  # (1, block_n)
        if u == 0:
            best_lp = lp
            best_idx = jnp.zeros(lp.shape, dtype=jnp.int32)
        else:
            take = lp > best_lp                           # strict '>' -> first-max ties
            best_lp = jnp.where(take, lp, best_lp)
            best_idx = jnp.where(take, jnp.int32(u), best_idx)

    val_ref[...] = jnp.exp(best_lp).astype(val_ref.dtype)  # single exp per sample
    idx_ref[...] = best_idx


def hgl_forward(x, mean, sigma, *, dim, units, block_n=2048):
    """x: (N, dim) float32; mean, sigma: (dim*units,) float32.
    Returns (values (N, 1) float32, indices (N, 1) int32)."""
    N = x.shape[0]
    x = x.astype(jnp.float32)
    mean = mean.astype(jnp.float32)
    sigma = sigma.astype(jnp.float32)

    # Lane-dense tile size: a multiple of 128, no larger than the padded N.
    block_n = max(128, min(int(block_n), pl.cdiv(N, 128) * 128))
    block_n = (block_n // 128) * 128
    Np = pl.cdiv(N, block_n) * block_n

    # Samples on the lane (last) axis; pad to a whole number of tiles.
    xT = jnp.pad(x, ((0, Np - N), (0, 0))).T              # (dim, Np)

    # Parameter prep (units*dim scalars): 1/|sigma| and per-unit log-normalizer.
    sig = jnp.abs(sigma).reshape(units, dim)
    inv_sig = (1.0 / sig).reshape(units, dim, 1)
    mean3 = mean.reshape(units, dim, 1)
    logz = (-jnp.sum(jnp.log(sig), axis=1)
            - 0.5 * dim * math.log(2.0 * math.pi))        # (units,)

    grid = (Np // block_n,)
    vals, idxs = pl.pallas_call(
        _hgl_kernel,
        out_shape=(
            jax.ShapeDtypeStruct((1, Np), jnp.float32),
            jax.ShapeDtypeStruct((1, Np), jnp.int32),
        ),
        grid_spec=pltpu.PrefetchScalarGridSpec(
            num_scalar_prefetch=0,
            grid=grid,
            in_specs=[
                pl.BlockSpec((dim, block_n), lambda i: (0, i)),
                pl.BlockSpec((units, dim, 1), lambda i: (0, 0, 0)),
                pl.BlockSpec((units, dim, 1), lambda i: (0, 0, 0)),
                pl.BlockSpec(memory_space=pltpu.MemorySpace.SMEM),
            ],
            out_specs=[
                pl.BlockSpec((1, block_n), lambda i: (0, i)),
                pl.BlockSpec((1, block_n), lambda i: (0, i)),
            ],
        ),
        compiler_params=pltpu.CompilerParams(
            dimension_semantics=("parallel",)),
    )(xT, mean3, inv_sig, logz)

    return vals[0, :N].reshape(N, 1), idxs[0, :N].reshape(N, 1)


def _per_unit_prob(x, mean, sigma, *, dim, units):
    """Pure-JAX per-unit probabilities (PyTorch formulation): (N, units)."""
    sig = jnp.abs(sigma)
    xr = jnp.tile(x, (1, units))                          # repeat(1, units)
    logp = (-0.5 * ((xr - mean) / sig) ** 2
            - jnp.log(sig) - 0.5 * math.log(2.0 * math.pi))
    pdf = jnp.exp(logp).reshape(x.shape[0], units, dim)
    return jnp.prod(pdf, axis=-1)


def hgl_reference(x, mean, sigma, *, dim, units):
    """Pure-JAX reference mirroring the PyTorch module."""
    p = _per_unit_prob(x, mean, sigma, dim=dim, units=units)
    return (jnp.max(p, axis=1, keepdims=True),
            jnp.argmax(p, axis=1, keepdims=True).astype(jnp.int32))


if __name__ == "__main__":
    # Module config from the script: dim=4 (iris), units=4, sef=1
    dim, units, sef = 4, 4, 1.0

    key = jax.random.PRNGKey(0)
    k_x1, k_x2, k_m, k_s = jax.random.split(key, 4)

    # --- Test 1: init_mode='normal' (mean = 0, sigma = 1 * sef), iris-sized N
    N1 = 150
    x1 = jax.random.normal(k_x1, (N1, dim), dtype=jnp.float32)
    mean1 = jnp.zeros((dim * units,), dtype=jnp.float32)
    sigma1 = jnp.ones((dim * units,), dtype=jnp.float32) * sef

    vals1, idxs1 = hgl_forward(x1, mean1, sigma1, dim=dim, units=units, block_n=128)
    vals1, idxs1 = jax.block_until_ready((vals1, idxs1))

    ref_vals1, ref_idxs1 = hgl_reference(x1, mean1, sigma1, dim=dim, units=units)
    assert vals1.shape == (N1, 1) and idxs1.shape == (N1, 1)
    assert vals1.dtype == jnp.float32 and idxs1.dtype == jnp.int32
    assert jnp.allclose(vals1, ref_vals1, rtol=1e-4, atol=1e-30)
    assert jnp.array_equal(idxs1, ref_idxs1)

    # --- Test 2: distinct units ('randn'-style means), larger N, tiled grid
    N2 = 4096
    x2 = jax.random.normal(k_x2, (N2, dim), dtype=jnp.float32)
    mean2 = jax.random.normal(k_m, (dim * units,), dtype=jnp.float32)
    sigma2 = jnp.abs(jax.random.normal(k_s, (dim * units,), dtype=jnp.float32)) + 1.0

    vals2, idxs2 = hgl_forward(x2, mean2, sigma2, dim=dim, units=units, block_n=512)
    vals2, idxs2 = jax.block_until_ready((vals2, idxs2))

    ref_vals2, ref_idxs2 = hgl_reference(x2, mean2, sigma2, dim=dim, units=units)
    assert jnp.allclose(vals2, ref_vals2, rtol=2e-4, atol=1e-20)
    # Check argmax only where the top-2 units are clearly separated; exact ties
    # / near-ties may legitimately differ at f32 precision between the
    # log-space (kernel) and product-space (reference) formulations.
    p2 = _per_unit_prob(x2, mean2, sigma2, dim=dim, units=units)
    ps = jnp.sort(p2, axis=1)
    clear = (ps[:, -1] - ps[:, -2]) > 1e-4 * ps[:, -1]
    assert jnp.array_equal(jnp.where(clear, idxs2[:, 0], 0),
                           jnp.where(clear, ref_idxs2[:, 0], 0))

    print("KERNEL_OK")
</pallas_src>

<mosaic_0001>
module attributes {stable_mosaic.version = 11 : i64} {
  func.func @_hgl_kernel(%arg0: i32, %arg1: memref<4x128xf32, #tpu.memory_space<vmem>>, %arg2: memref<4x4x1xf32, #tpu.memory_space<vmem>>, %arg3: memref<4x4x1xf32, #tpu.memory_space<vmem>>, %arg4: memref<4xf32, #tpu.memory_space<smem>>, %arg5: memref<1x128xf32, #tpu.memory_space<vmem>>, %arg6: memref<1x128xi32, #tpu.memory_space<vmem>>) attributes {dimension_semantics = [#tpu.dimension_semantics<parallel>], iteration_bounds = array<i64: 2>, scalar_prefetch = 0 : i64, scratch_operands = 0 : i64, tpu.core_type = #tpu.core_type<tc>, window_params = [{transform_indices = @transform_0, window_bounds = array<i64: 4, 128>}, {pipeline_mode = #tpu.pipeline_mode<synchronous>, transform_indices = @transform_1, window_bounds = array<i64: 4, 4, 1>}, {pipeline_mode = #tpu.pipeline_mode<synchronous>, transform_indices = @transform_2, window_bounds = array<i64: 4, 4, 1>}, {transform_indices = @transform_3, window_bounds = array<i64: 4>}, {transform_indices = @transform_4, window_bounds = array<i64: 1, 128>}, {transform_indices = @transform_5, window_bounds = array<i64: 1, 128>}]} {
    %c0 = arith.constant 0 : index
    %c0_0 = arith.constant 0 : index
    %0 = vector.load %arg1[%c0, %c0_0] : memref<4x128xf32, #tpu.memory_space<vmem>>, vector<4x128xf32>
    %c0_1 = arith.constant 0 : index
    %c0_2 = arith.constant 0 : index
    %c0_3 = arith.constant 0 : index
    %1 = vector.load %arg2[%c0_1, %c0_2, %c0_3] : memref<4x4x1xf32, #tpu.memory_space<vmem>>, vector<1x4x1xf32>
    %2 = vector.shape_cast %1 : vector<1x4x1xf32> to vector<4x1xf32>
    %3 = vector.broadcast %2 : vector<4x1xf32> to vector<4x128xf32>
    %4 = arith.subf %0, %3 : vector<4x128xf32>
    %c0_4 = arith.constant 0 : index
    %c0_5 = arith.constant 0 : index
    %c0_6 = arith.constant 0 : index
    %5 = vector.load %arg3[%c0_4, %c0_5, %c0_6] : memref<4x4x1xf32, #tpu.memory_space<vmem>>, vector<1x4x1xf32>
    %6 = vector.shape_cast %5 : vector<1x4x1xf32> to vector<4x1xf32>
    %7 = vector.broadcast %6 : vector<4x1xf32> to vector<4x128xf32>
    %8 = arith.mulf %4, %7 : vector<4x128xf32>
    %c0_7 = arith.constant 0 : index
    %9 = memref.load %arg4[%c0_7] : memref<4xf32, #tpu.memory_space<smem>>
    %10 = arith.mulf %8, %8 : vector<4x128xf32>
    %cst = arith.constant dense<0.000000e+00> : vector<128xf32>
    %11 = vector.multi_reduction <add>, %10, %cst [0] : vector<4x128xf32> to vector<128xf32>
    %12 = vector.shape_cast %11 : vector<128xf32> to vector<1x128xf32>
    %cst_8 = arith.constant 5.000000e-01 : f32
    %13 = vector.broadcast %cst_8 : f32 to vector<1x128xf32>
    %14 = arith.mulf %13, %12 : vector<1x128xf32>
    %15 = vector.broadcast %9 : f32 to vector<1x128xf32>
    %16 = arith.subf %15, %14 : vector<1x128xf32>
    %c0_i32 = arith.constant 0 : i32
    %17 = vector.broadcast %c0_i32 : i32 to vector<1x128xi32>
    %c1 = arith.constant 1 : index
    %c0_9 = arith.constant 0 : index
    %c0_10 = arith.constant 0 : index
    %18 = vector.load %arg2[%c1, %c0_9, %c0_10] : memref<4x4x1xf32, #tpu.memory_space<vmem>>, vector<1x4x1xf32>
    %19 = vector.shape_cast %18 : vector<1x4x1xf32> to vector<4x1xf32>
    %20 = vector.broadcast %19 : vector<4x1xf32> to vector<4x128xf32>
    %21 = arith.subf %0, %20 : vector<4x128xf32>
    %c1_11 = arith.constant 1 : index
    %c0_12 = arith.constant 0 : index
    %c0_13 = arith.constant 0 : index
    %22 = vector.load %arg3[%c1_11, %c0_12, %c0_13] : memref<4x4x1xf32, #tpu.memory_space<vmem>>, vector<1x4x1xf32>
    %23 = vector.shape_cast %22 : vector<1x4x1xf32> to vector<4x1xf32>
    %24 = vector.broadcast %23 : vector<4x1xf32> to vector<4x128xf32>
    %25 = arith.mulf %21, %24 : vector<4x128xf32>
    %c1_14 = arith.constant 1 : index
    %26 = memref.load %arg4[%c1_14] : memref<4xf32, #tpu.memory_space<smem>>
    %27 = arith.mulf %25, %25 : vector<4x128xf32>
    %cst_15 = arith.constant dense<0.000000e+00> : vector<128xf32>
    %28 = vector.multi_reduction <add>, %27, %cst_15 [0] : vector<4x128xf32> to vector<128xf32>
    %29 = vector.shape_cast %28 : vector<128xf32> to vector<1x128xf32>
    %cst_16 = arith.constant 5.000000e-01 : f32
    %30 = vector.broadcast %cst_16 : f32 to vector<1x128xf32>
    %31 = arith.mulf %30, %29 : vector<1x128xf32>
    %32 = vector.broadcast %26 : f32 to vector<1x128xf32>
    %33 = arith.subf %32, %31 : vector<1x128xf32>
    %34 = arith.cmpf ogt, %33, %16 : vector<1x128xf32>
    %35 = arith.select %34, %33, %16 : vector<1x128xi1>, vector<1x128xf32>
    %c1_i32 = arith.constant 1 : i32
    %36 = vector.broadcast %c1_i32 : i32 to vector<1x128xi32>
    %37 = arith.select %34, %36, %17 : vector<1x128xi1>, vector<1x128xi32>
    %c2 = arith.constant 2 : index
    %c0_17 = arith.constant 0 : index
    %c0_18 = arith.constant 0 : index
    %38 = vector.load %arg2[%c2, %c0_17, %c0_18] : memref<4x4x1xf32, #tpu.memory_space<vmem>>, vector<1x4x1xf32>
    %39 = vector.shape_cast %38 : vector<1x4x1xf32> to vector<4x1xf32>
    %40 = vector.broadcast %39 : vector<4x1xf32> to vector<4x128xf32>
    %41 = arith.subf %0, %40 : vector<4x128xf32>
    %c2_19 = arith.constant 2 : index
    %c0_20 = arith.constant 0 : index
    %c0_21 = arith.constant 0 : index
    %42 = vector.load %arg3[%c2_19, %c0_20, %c0_21] : memref<4x4x1xf32, #tpu.memory_space<vmem>>, vector<1x4x1xf32>
    %43 = vector.shape_cast %42 : vector<1x4x1xf32> to vector<4x1xf32>
    %44 = vector.broadcast %43 : vector<4x1xf32> to vector<4x128xf32>
    %45 = arith.mulf %41, %44 : vector<4x128xf32>
    %c2_22 = arith.constant 2 : index
    %46 = memref.load %arg4[%c2_22] : memref<4xf32, #tpu.memory_space<smem>>
    %47 = arith.mulf %45, %45 : vector<4x128xf32>
    %cst_23 = arith.constant dense<0.000000e+00> : vector<128xf32>
    %48 = vector.multi_reduction <add>, %47, %cst_23 [0] : vector<4x128xf32> to vector<128xf32>
    %49 = vector.shape_cast %48 : vector<128xf32> to vector<1x128xf32>
    %cst_24 = arith.constant 5.000000e-01 : f32
    %50 = vector.broadcast %cst_24 : f32 to vector<1x128xf32>
    %51 = arith.mulf %50, %49 : vector<1x128xf32>
    %52 = vector.broadcast %46 : f32 to vector<1x128xf32>
    %53 = arith.subf %52, %51 : vector<1x128xf32>
    %54 = arith.cmpf ogt, %53, %35 : vector<1x128xf32>
    %55 = arith.select %54, %53, %35 : vector<1x128xi1>, vector<1x128xf32>
    %c2_i32 = arith.constant 2 : i32
    %56 = vector.broadcast %c2_i32 : i32 to vector<1x128xi32>
    %57 = arith.select %54, %56, %37 : vector<1x128xi1>, vector<1x128xi32>
    %c3 = arith.constant 3 : index
    %c0_25 = arith.constant 0 : index
    %c0_26 = arith.constant 0 : index
    %58 = vector.load %arg2[%c3, %c0_25, %c0_26] : memref<4x4x1xf32, #tpu.memory_space<vmem>>, vector<1x4x1xf32>
    %59 = vector.shape_cast %58 : vector<1x4x1xf32> to vector<4x1xf32>
    %60 = vector.broadcast %59 : vector<4x1xf32> to vector<4x128xf32>
    %61 = arith.subf %0, %60 : vector<4x128xf32>
    %c3_27 = arith.constant 3 : index
    %c0_28 = arith.constant 0 : index
    %c0_29 = arith.constant 0 : index
    %62 = vector.load %arg3[%c3_27, %c0_28, %c0_29] : memref<4x4x1xf32, #tpu.memory_space<vmem>>, vector<1x4x1xf32>
    %63 = vector.shape_cast %62 : vector<1x4x1xf32> to vector<4x1xf32>
    %64 = vector.broadcast %63 : vector<4x1xf32> to vector<4x128xf32>
    %65 = arith.mulf %61, %64 : vector<4x128xf32>
    %c3_30 = arith.constant 3 : index
    %66 = memref.load %arg4[%c3_30] : memref<4xf32, #tpu.memory_space<smem>>
    %67 = arith.mulf %65, %65 : vector<4x128xf32>
    %cst_31 = arith.constant dense<0.000000e+00> : vector<128xf32>
    %68 = vector.multi_reduction <add>, %67, %cst_31 [0] : vector<4x128xf32> to vector<128xf32>
    %69 = vector.shape_cast %68 : vector<128xf32> to vector<1x128xf32>
    %cst_32 = arith.constant 5.000000e-01 : f32
    %70 = vector.broadcast %cst_32 : f32 to vector<1x128xf32>
    %71 = arith.mulf %70, %69 : vector<1x128xf32>
    %72 = vector.broadcast %66 : f32 to vector<1x128xf32>
    %73 = arith.subf %72, %71 : vector<1x128xf32>
    %74 = arith.cmpf ogt, %73, %55 : vector<1x128xf32>
    %75 = arith.select %74, %73, %55 : vector<1x128xi1>, vector<1x128xf32>
    %c3_i32 = arith.constant 3 : i32
    %76 = vector.broadcast %c3_i32 : i32 to vector<1x128xi32>
    %77 = arith.select %74, %76, %57 : vector<1x128xi1>, vector<1x128xi32>
    %78 = math.exp %75 : vector<1x128xf32>
    %c0_33 = arith.constant 0 : index
    %c0_34 = arith.constant 0 : index
    %79 = vector.load %arg5[%c0_33, %c0_34] : memref<1x128xf32, #tpu.memory_space<vmem>>, vector<1x128xf32>
    tpu.vector_store %arg5[%c0_33, %c0_34], %78 {strides = array<i32>} : memref<1x128xf32, #tpu.memory_space<vmem>>, vector<1x128xf32>,
    %c0_35 = arith.constant 0 : index
    %c0_36 = arith.constant 0 : index
    %80 = vector.load %arg6[%c0_35, %c0_36] : memref<1x128xi32, #tpu.memory_space<vmem>>, vector<1x128xi32>
    tpu.vector_store %arg6[%c0_35, %c0_36], %77 {strides = array<i32>} : memref<1x128xi32, #tpu.memory_space<vmem>>, vector<1x128xi32>,
    return
  }
  func.func @transform_0(%arg0: i32) -> (i32, i32) {
    %c0_i32 = arith.constant 0 : i32
    %c0_i32_0 = arith.constant 0 : i32
    return %c0_i32, %arg0 : i32, i32
  }
  func.func @transform_1(%arg0: i32) -> (i32, i32, i32) {
    %c0_i32 = arith.constant 0 : i32
    %c0_i32_0 = arith.constant 0 : i32
    %c0_i32_1 = arith.constant 0 : i32
    %c0_i32_2 = arith.constant 0 : i32
    return %c0_i32, %c0_i32_0, %c0_i32_1 : i32, i32, i32
  }
  func.func @transform_2(%arg0: i32) -> (i32, i32, i32) {
    %c0_i32 = arith.constant 0 : i32
    %c0_i32_0 = arith.constant 0 : i32
    %c0_i32_1 = arith.constant 0 : i32
    %c0_i32_2 = arith.constant 0 : i32
    return %c0_i32, %c0_i32_0, %c0_i32_1 : i32, i32, i32
  }
  func.func @transform_3(%arg0: i32) -> i32 {
    %c0_i32 = arith.constant 0 : i32
    %c0_i32_0 = arith.constant 0 : i32
    return %c0_i32 : i32
  }
  func.func @transform_4(%arg0: i32) -> (i32, i32) {
    %c0_i32 = arith.constant 0 : i32
    %c0_i32_0 = arith.constant 0 : i32
    return %c0_i32, %arg0 : i32, i32
  }
  func.func @transform_5(%arg0: i32) -> (i32, i32) {
    %c0_i32 = arith.constant 0 : i32
    %c0_i32_0 = arith.constant 0 : i32
    return %c0_i32, %arg0 : i32, i32
  }
}

</mosaic_0001>

<llo_original>
// kernel: tpu_custom_call.1
$region0: #{tpu_custom_call.1}
  #allocation0 [shape = 'u32[]', space=smem, size = 0x4, offset = 0x4, fixed_abs, tag = 'smem constant byte address 0x4 - core index']
  #allocation1 [shape = 'u32[144,128]{1,0:T(1,128)}', space=vmem, size = 0x12000, scoped, tag = 'internal scratch']
  %s0 = inlined_call_operand.vmem [shape: f32[4,256], index: 0, kind: input, shape index: {}]
  %s1 = inlined_call_operand.vmem [shape: f32[4,4,1], index: 1, kind: input, shape index: {}]
  %s2 = inlined_call_operand.vmem [shape: f32[4,4,1], index: 2, kind: input, shape index: {}]
  %s3 = inlined_call_operand.vmem [shape: f32[4], index: 3, kind: input, shape index: {}]
  %s4 = inlined_call_operand.hbm [shape: f32[1,256], index: 4, kind: output, shape index: {0}]
  %s5 = inlined_call_operand.hbm [shape: s32[1,256], index: 5, kind: output, shape index: {1}]
  %6 = xla_tuple %s4, %s5
  %s7 = sld [smem:[#allocation0]]
  $region61: #{tpu_custom_call.1} parent=0
    _
  %s9 = ssub.s32 1, %s7
  %s10 = scalar_select 0, %s9, %s7
  $region1: #{tpu_custom_call.1} parent=0
    #allocation2 [shape = 'u8[512]{0}', space=smem, size = 0x200, scoped, tag = 'input window, operand 3, single buffered']
    #allocation3 [shape = 's32[2]{0}', space=sflag, size = 0x8, scoped, tag = 'scoped memory for tpu_custom_call.1']
    #allocation4 [shape = 's32[2]{0}', space=sflag, size = 0x8, scoped, tag = 'scoped memory for tpu_custom_call.1']
    #allocation5 [shape = 'u8[1024]{0}', space=vmem, size = 0x400, scoped, tag = 'output window, operand 0']
    #allocation6 [shape = 'u8[1024]{0}', space=vmem, size = 0x400, scoped, tag = 'output window, operand 1']
    #allocation7 [shape = 's32[2]{0}', space=sflag, size = 0x8, scoped, tag = 'scoped memory for tpu_custom_call.1']
    %11 = vsyncpa [#allocation4], 0
    %12 = vsyncpa [#allocation3], 0
    %s13 = scalar_lea.sflag [#allocation3], 1
    %14 = vsyncpa %s13, 0
    %15 = vsyncpa [#allocation7], 0
    %s16 = scalar_lea.sflag [#allocation7], 1
    %17 = vsyncpa %s16, 0
    loop: start=0, step=1, limit=4
    $region2: #{tpu_custom_call.1} parent=1 // loop_pre_header
      _
    $region3: #{tpu_custom_call.1} parent=1 // loop_header
      %s19 = sphi 0, %s23
      %p20 = scmp.ge.s32.totalorder %s19, 4
      %s29 = sphi 0, %s31
      %s32 = sphi 0, %s29
      %s33 = sphi 0, %s32
      %s49 = sphi 0, %s33
      %s53 = sphi 0, %s53
      %s55 = sphi 0, %s53
      %s56 = sphi 0, %s55
      %s70 = sphi 0, %s56
      %s74 = sphi 0, %s74
      %s76 = sphi 0, %s74
      %s77 = sphi 0, %s76
      %s91 = sphi 0, %s77
      %s95 = sphi 0, %s95
      %s97 = sphi 0, %s95
      %s98 = sphi 0, %s97
      %s112 = sphi 0, %s98
      %s118 = sphi 0, %s120
      %s121 = sphi 0, %s118
      %s122 = sphi 0, %s121
      %s138 = sphi 0, %s122
      %s144 = sphi 0, %s146
      %s147 = sphi 0, %s144
      %s148 = sphi 0, %s147
      %s164 = sphi 0, %s148
    $region4: #{tpu_custom_call.1} parent=1 // loop_header_branch
      %22 = sbr.rel (%p20) target = $region8
    $region5: #{tpu_custom_call.1} parent=1 // loop_body
      %s24 = ssub.s32 %s19, 1
      %s25 = ssub.s32 %s19, 2
      %s26 = sadd.s32 %s19, 1
      %s27 = ssub.s32 %s19, %s26
      %p28 = scmp.eq.s32.totalorder %s27, 0
      %s30 = sadd.s32 %s29, 1
      %s31 = scalar_select %p28, %s29, %s30
      %p34 = pneg %p28
      %p35 = scmp.eq.s32.totalorder %s19, 1
      %p36 = por %p34, %p35
      %p37 = scmp.ne.s32.totalorder %s29, %s32
      %p38 = scmp.eq.s32.totalorder %s19, 0
      %p39 = por %p37, %p38
      %p40 = scmp.ne.s32.totalorder %s29, %s32
      %p41 = scmp.eq.s32.totalorder %s24, 1
      %p42 = por %p40, %p41
      %p43 = scmp.ne.s32.totalorder %s32, %s33
      %p44 = scmp.eq.s32.totalorder %s24, 0
      %p45 = por %p43, %p44
      %p46 = scmp.ne.s32.totalorder %s32, %s33
      %p47 = scmp.eq.s32.totalorder %s25, 1
      %p48 = por %p46, %p47
      %p50 = scmp.ne.s32.totalorder %s33, %s49
      %p51 = scmp.eq.s32.totalorder %s25, 0
      %p52 = por %p50, %p51
      %s54 = sadd.s32 %s53, 1
      %p57 = scmp.eq.s32.totalorder %s19, 1
      %p58 = scmp.ne.s32.totalorder %s53, %s55
      %p59 = scmp.eq.s32.totalorder %s19, 0
      %p60 = por %p58, %p59
      %p61 = scmp.ne.s32.totalorder %s53, %s55
      %p62 = scmp.eq.s32.totalorder %s24, 1
      %p63 = por %p61, %p62
      %p64 = scmp.ne.s32.totalorder %s55, %s56
      %p65 = scmp.eq.s32.totalorder %s24, 0
      %p66 = por %p64, %p65
      %p67 = scmp.ne.s32.totalorder %s55, %s56
      %p68 = scmp.eq.s32.totalorder %s25, 1
      %p69 = por %p67, %p68
      %p71 = scmp.ne.s32.totalorder %s56, %s70
      %p72 = scmp.eq.s32.totalorder %s25, 0
      %p73 = por %p71, %p72
      %s75 = sadd.s32 %s74, 1
      %p78 = scmp.eq.s32.totalorder %s19, 1
      %p79 = scmp.ne.s32.totalorder %s74, %s76
      %p80 = scmp.eq.s32.totalorder %s19, 0
      %p81 = por %p79, %p80
      %p82 = scmp.ne.s32.totalorder %s74, %s76
      %p83 = scmp.eq.s32.totalorder %s24, 1
      %p84 = por %p82, %p83
      %p85 = scmp.ne.s32.totalorder %s76, %s77
      %p86 = scmp.eq.s32.totalorder %s24, 0
      %p87 = por %p85, %p86
      %p88 = scmp.ne.s32.totalorder %s76, %s77
      %p89 = scmp.eq.s32.totalorder %s25, 1
      %p90 = por %p88, %p89
      %p92 = scmp.ne.s32.totalorder %s77, %s91
      %p93 = scmp.eq.s32.totalorder %s25, 0
      %p94 = por %p92, %p93
      %s96 = sadd.s32 %s95, 1
      %p99 = scmp.eq.s32.totalorder %s19, 1
      %p100 = scmp.ne.s32.totalorder %s95, %s97
      %p101 = scmp.eq.s32.totalorder %s19, 0
      %p102 = por %p100, %p101
      %p103 = scmp.ne.s32.totalorder %s95, %s97
      %p104 = scmp.eq.s32.totalorder %s24, 1
      %p105 = por %p103, %p104
      %p106 = scmp.ne.s32.totalorder %s97, %s98
      %p107 = scmp.eq.s32.totalorder %s24, 0
      %p108 = por %p106, %p107
      %p109 = scmp.ne.s32.totalorder %s97, %s98
      %p110 = scmp.eq.s32.totalorder %s25, 1
      %p111 = por %p109, %p110
      %p113 = scmp.ne.s32.totalorder %s98, %s112
      %p114 = scmp.eq.s32.totalorder %s25, 0
      %p115 = por %p113, %p114
      %s116 = ssub.s32 %s19, %s26
      %p117 = scmp.eq.s32.totalorder %s116, 0
      %s119 = sadd.s32 %s118, 1
      %s120 = scalar_select %p117, %s118, %s119
      %p123 = pneg %p117
      %p124 = scmp.eq.s32.totalorder %s19, 1
      %p125 = por %p123, %p124
      %p126 = scmp.ne.s32.totalorder %s118, %s121
      %p127 = scmp.eq.s32.totalorder %s19, 0
      %p128 = por %p126, %p127
      %p129 = scmp.ne.s32.totalorder %s118, %s121
      %p130 = scmp.eq.s32.totalorder %s24, 1
      %p131 = por %p129, %p130
      %p132 = scmp.ne.s32.totalorder %s121, %s122
      %p133 = scmp.eq.s32.totalorder %s24, 0
      %p134 = por %p132, %p133
      %p135 = scmp.ne.s32.totalorder %s121, %s122
      %p136 = scmp.eq.s32.totalorder %s25, 1
      %p137 = por %p135, %p136
      %p139 = scmp.ne.s32.totalorder %s122, %s138
      %p140 = scmp.eq.s32.totalorder %s25, 0
      %p141 = por %p139, %p140
      %s142 = ssub.s32 %s19, %s26
      %p143 = scmp.eq.s32.totalorder %s142, 0
      %s145 = sadd.s32 %s144, 1
      %s146 = scalar_select %p143, %s144, %s145
      %p149 = pneg %p143
      %p150 = scmp.eq.s32.totalorder %s19, 1
      %p151 = por %p149, %p150
      %p152 = scmp.ne.s32.totalorder %s144, %s147
      %p153 = scmp.eq.s32.totalorder %s19, 0
      %p154 = por %p152, %p153
      %p155 = scmp.ne.s32.totalorder %s144, %s147
      %p156 = scmp.eq.s32.totalorder %s24, 1
      %p157 = por %p155, %p156
      %p158 = scmp.ne.s32.totalorder %s147, %s148
      %p159 = scmp.eq.s32.totalorder %s24, 0
      %p160 = por %p158, %p159
      %p161 = scmp.ne.s32.totalorder %s147, %s148
      %p162 = scmp.eq.s32.totalorder %s25, 1
      %p163 = por %p161, %p162
      %p165 = scmp.ne.s32.totalorder %s148, %s164
      %p166 = scmp.eq.s32.totalorder %s25, 0
      %p167 = por %p165, %p166
      %p168 = scmp.le.s32.totalorder 1, %s19
      %p169 = scmp.lt.s32.totalorder %s19, 3
      %p170 = pnand %p168, %p169
      %p171 = pneg %p170
      // Predicated region
      $region9: #{tpu_custom_call.1} parent=5 // pred_check
        _
      $region10: #{tpu_custom_call.1} parent=5 // pred_check_branch
        %173 = sbr.rel (%p170) target = $region12
      $region11: #{tpu_custom_call.1} parent=5 // pred_region
        %s174 = ssub.s32 %s19, 1
        // Predicated region
        $region13: #{tpu_custom_call.1} parent=11 // pred_check
          %p175 = pneg %p66
        $region14: #{tpu_custom_call.1} parent=11 // pred_check_branch
          %177 = sbr.rel (%p175) target = $region16
        $region15: #{tpu_custom_call.1} parent=11 // pred_region
          _
        $region16: #{tpu_custom_call.1} parent=11 // pred_fallthru
          _
        // Predicated region
        $region17: #{tpu_custom_call.1} parent=11 // pred_check
          %p178 = pneg %p87
        $region18: #{tpu_custom_call.1} parent=11 // pred_check_branch
          %180 = sbr.rel (%p178) target = $region20
        $region19: #{tpu_custom_call.1} parent=11 // pred_region
          _
        $region20: #{tpu_custom_call.1} parent=11 // pred_fallthru
          _
        // Predicated region
        $region21: #{tpu_custom_call.1} parent=11 // pred_check
          %p181 = pneg %p108
        $region22: #{tpu_custom_call.1} parent=11 // pred_check_branch
          %183 = sbr.rel (%p181) target = $region24
        $region23: #{tpu_custom_call.1} parent=11 // pred_region
          %s185 = ssub.s32 16, 16
          %186 = vsyncadd [#allocation4], %s185
          %s188 = sshll.u32 %s3, 4
          %s189 = int_to_ptr.vmem [resolvable:$true] %s188
          %191 = dma.vmem_to_smem %s189, 16, [#allocation2], [#allocation4]
        $region24: #{tpu_custom_call.1} parent=11 // pred_fallthru
          _
      $region12: #{tpu_custom_call.1} parent=5 // pred_fallthru
        _
      %p192 = scmp.lt.s32.totalorder %s19, 2
      // Predicated region
      $region25: #{tpu_custom_call.1} parent=5 // pred_check
        %p193 = pneg %p192
      $region26: #{tpu_custom_call.1} parent=5 // pred_check_branch
        %195 = sbr.rel (%p193) target = $region28
      $region27: #{tpu_custom_call.1} parent=5 // pred_region
        // Predicated region
        $region29: #{tpu_custom_call.1} parent=27 // pred_check
          %p196 = pneg %p39
        $region30: #{tpu_custom_call.1} parent=27 // pred_check_branch
          %198 = sbr.rel (%p196) target = $region32
        $region31: #{tpu_custom_call.1} parent=27 // pred_region
          %p199 = scmp.lt.s32.totalorder %s19, 1
          %s200 = scalar_select %p199, %s19, 1
          %s201 = smul.addr %s200, 4
          %s202 = scalar_lea.vmem %s0, %s201
        $region32: #{tpu_custom_call.1} parent=27 // pred_fallthru
          _
      $region28: #{tpu_custom_call.1} parent=5 // pred_fallthru
        _
      %p203 = scmp.le.s32.totalorder 1, %s19
      %p204 = scmp.lt.s32.totalorder %s19, 3
      %p205 = pnand %p203, %p204
      %p206 = pneg %p205
      // Predicated region
      $region33: #{tpu_custom_call.1} parent=5 // pred_check
        _
      $region34: #{tpu_custom_call.1} parent=5 // pred_check_branch
        %208 = sbr.rel (%p205) target = $region36
      $region35: #{tpu_custom_call.1} parent=5 // pred_region
        %s209 = ssub.s32 %s19, 1
        // Predicated region
        $region37: #{tpu_custom_call.1} parent=35 // pred_check
          %p210 = pneg %p108
        $region38: #{tpu_custom_call.1} parent=35 // pred_check_branch
          %212 = sbr.rel (%p210) target = $region40
        $region39: #{tpu_custom_call.1} parent=35 // pred_region
          %213 = dma.done [#allocation4], 16
        $region40: #{tpu_custom_call.1} parent=35 // pred_fallthru
          _
        %214 = sfence
        %p215 = scmp.lt.s32.totalorder %s24, 1
        %s216 = scalar_select %p215, %s24, 1
        %s217 = smul.addr %s216, 4
        %s218 = scalar_lea.vmem %s0, %s217
        %p219 = pneg %p45
        %p220 = pneg %p42
        %p221 = pneg %p66
        %p222 = pneg %p63
        %p223 = pneg %p87
        %p224 = pneg %p84
        %p225 = pneg %p108
        %p226 = pneg %p105
        %p227 = pneg %p134
        %p228 = pneg %p131
        %s229 = sand.u32 %s121, 1
        %s230 = scalar_lea.sflag [#allocation3], %s229
        %s231 = sand.u32 %s121, 1
        %s232 = scalar_lea.vmem [#allocation5], %s231
        %p233 = pneg %p160
        %p234 = pneg %p157
        %s235 = sand.u32 %s147, 1
        %s236 = scalar_lea.sflag [#allocation7], %s235
        %s237 = sand.u32 %s147, 1
        %s238 = scalar_lea.vmem [#allocation6], %s237
        %p239 = scmp.lt.s32.totalorder %s24, 1
        %s240 = scalar_select %p239, %s24, 1
        %s241 = smul.addr %s240, 4
        %s242 = scalar_lea.vmem %s0, %s241
        %v243 = vld [vmem:[%s242] sm:$0xf]
        %v244 = vld [vmem:[%s1] sm:$0xf]
        %246 = vset.pattern.permute.xlu0 0
        %247 = vperm.xlu0 %246, %v244
        %v248 = vpop.permute.xlu0 %247
        %v250 = vsub.f32 %v243, %v248
        %v251 = vld [vmem:[%s2] sm:$0xf]
        %253 = vset.pattern.permute.xlu0 0
        %254 = vperm.xlu0 %253, %v251
        %v255 = vpop.permute.xlu0 %254
        %v257 = vmul.f32 %v250, %v255
        %s258 = sld [smem:[#allocation2]]
        %v259 = vmul.f32 %v257, %v257
        %vm260 = vcmask 1043456
        %v261 = vsel %vm260, %v259, 0.0
        %v262 = vrot.slane %v261, 4
        %v263 = vadd.f32 %v261, %v262
        %v264 = vrot.slane %v263, 2
        %v265 = vadd.f32 %v263, %v264
        %v266 = vrot.slane %v265, 1
        %v267 = vadd.f32 %v265, %v266
        %v268 = vmul.f32 %v267, 0.5
        %v269 = vstv %s258
        %v270 = vsub.f32 %v269, %v268
        %s271 = scalar_lea.vmem %s1, 4
        %v272 = vld [vmem:[%s271] sm:$0xf]
        %274 = vset.pattern.permute.xlu0 0
        %275 = vperm.xlu0 %274, %v272
        %v276 = vpop.permute.xlu0 %275
        %v278 = vsub.f32 %v243, %v276
        %s279 = scalar_lea.vmem %s2, 4
        %v280 = vld [vmem:[%s279] sm:$0xf]
        %282 = vset.pattern.permute.xlu0 0
        %283 = vperm.xlu0 %282, %v280
        %v284 = vpop.permute.xlu0 %283
        %v286 = vmul.f32 %v278, %v284
        %s287 = sld [smem:[#allocation2 + $0x1]]
        %v288 = vmul.f32 %v286, %v286
        %v289 = vsel %vm260, %v288, 0.0
        %v290 = vrot.slane %v289, 4
        %v291 = vadd.f32 %v289, %v290
        %v292 = vrot.slane %v291, 2
        %v293 = vadd.f32 %v291, %v292
        %v294 = vrot.slane %v293, 1
        %v295 = vadd.f32 %v293, %v294
        %v296 = vmul.f32 %v295, 0.5
        %v297 = vstv %s287
        %v298 = vsub.f32 %v297, %v296
        %vm299 = vcmp.gt.f32.partialorder %v298, %v270
        %v300 = vsel %vm299, %v298, %v270
        %v301 = vsel %vm299, 1, 0
        %s302 = scalar_lea.vmem %s1, 8
        %v303 = vld [vmem:[%s302] sm:$0xf]
        %305 = vset.pattern.permute.xlu0 0
        %306 = vperm.xlu0 %305, %v303
        %v307 = vpop.permute.xlu0 %306
        %v309 = vsub.f32 %v243, %v307
        %s310 = scalar_lea.vmem %s2, 8
        %v311 = vld [vmem:[%s310] sm:$0xf]
        %313 = vset.pattern.permute.xlu0 0
        %314 = vperm.xlu0 %313, %v311
        %v315 = vpop.permute.xlu0 %314
        %v317 = vmul.f32 %v309, %v315
        %s318 = sld [smem:[#allocation2 + $0x2]]
        %v319 = vmul.f32 %v317, %v317
        %v320 = vsel %vm260, %v319, 0.0
        %v321 = vrot.slane %v320, 4
        %v322 = vadd.f32 %v320, %v321
        %v323 = vrot.slane %v322, 2
        %v324 = vadd.f32 %v322, %v323
        %v325 = vrot.slane %v324, 1
        %v326 = vadd.f32 %v324, %v325
        %v327 = vmul.f32 %v326, 0.5
        %v328 = vstv %s318
        %v329 = vsub.f32 %v328, %v327
        %vm330 = vcmp.gt.f32.partialorder %v329, %v300
        %v331 = vsel %vm330, %v329, %v300
        %v332 = vsel %vm330, 2, %v301
        %s333 = scalar_lea.vmem %s1, 12
        %v334 = vld [vmem:[%s333] sm:$0xf]
        %336 = vset.pattern.permute.xlu0 0
        %337 = vperm.xlu0 %336, %v334
        %v338 = vpop.permute.xlu0 %337
        %v340 = vsub.f32 %v243, %v338
        %s341 = scalar_lea.vmem %s2, 12
        %v342 = vld [vmem:[%s341] sm:$0xf]
        %344 = vset.pattern.permute.xlu0 0
        %345 = vperm.xlu0 %344, %v342
        %v346 = vpop.permute.xlu0 %345
        %v348 = vmul.f32 %v340, %v346
        %s349 = sld [smem:[#allocation2 + $0x3]]
        %v350 = vmul.f32 %v348, %v348
        %v351 = vsel %vm260, %v350, 0.0
        %v352 = vrot.slane %v351, 4
        %v353 = vadd.f32 %v351, %v352
        %v354 = vrot.slane %v353, 2
        %v355 = vadd.f32 %v353, %v354
        %v356 = vrot.slane %v355, 1
        %v357 = vadd.f32 %v355, %v356
        %v358 = vmul.f32 %v357, 0.5
        %v359 = vstv %s349
        %v360 = vsub.f32 %v359, %v358
        %vm361 = vcmp.gt.f32.partialorder %v360, %v331
        %v362 = vsel %vm361, %v360, %v331
        %v363 = vsel %vm361, 3, %v332
        %v364 = vmul.f32 %v362, 1.442695
        %v365 = vpow.pop %v364
        %366 = vst [vmem:[%s232] sm:$0x1] %v365
        %367 = vst [vmem:[%s238] sm:$0x1] %v363
        %s368 = sand.u32 %s121, 1
        %s369 = scalar_lea.sflag [#allocation3], %s368
        %s370 = sand.u32 %s121, 1
        %s371 = scalar_lea.vmem [#allocation5], %s370
        %s372 = sand.u32 %s147, 1
        %s373 = scalar_lea.sflag [#allocation7], %s372
        %s374 = sand.u32 %s147, 1
        %s375 = scalar_lea.vmem [#allocation6], %s374
        // Predicated region
        $region41: #{tpu_custom_call.1} parent=35 // pred_check
          %p376 = pneg %p131
        $region42: #{tpu_custom_call.1} parent=35 // pred_check_branch
          %378 = sbr.rel (%p376) target = $region44
        $region43: #{tpu_custom_call.1} parent=35 // pred_region
          %s380 = ssub.s32 16, 16
          %381 = vsyncadd %s369, %s380
          %s382 = smul.addr %s24, 16
          %s383 = scalar_lea.hbm %s4, %s382
          %s385 = sshll.u32 %s371, 4
          %s386 = int_to_ptr.vmem [resolvable:$true] %s385
          %388 = dma.vmem_to_hbm [thread:$0]  %s386, 16, %s383, %s369
        $region44: #{tpu_custom_call.1} parent=35 // pred_fallthru
          _
        // Predicated region
        $region45: #{tpu_custom_call.1} parent=35 // pred_check
          %p389 = pneg %p157
        $region46: #{tpu_custom_call.1} parent=35 // pred_check_branch
          %391 = sbr.rel (%p389) target = $region48
        $region47: #{tpu_custom_call.1} parent=35 // pred_region
          %s393 = ssub.s32 16, 16
          %394 = vsyncadd %s373, %s393
          %s395 = smul.addr %s24, 16
          %s396 = scalar_lea.hbm %s5, %s395
          %s398 = sshll.u32 %s375, 4
          %s399 = int_to_ptr.vmem [resolvable:$true] %s398
          %401 = dma.vmem_to_hbm [thread:$0]  %s399, 16, %s396, %s373
        $region48: #{tpu_custom_call.1} parent=35 // pred_fallthru
          _
      $region36: #{tpu_custom_call.1} parent=5 // pred_fallthru
        _
      %p402 = scmp.le.s32.totalorder 2, %s19
      // Predicated region
      $region49: #{tpu_custom_call.1} parent=5 // pred_check
        %p403 = pneg %p402
      $region50: #{tpu_custom_call.1} parent=5 // pred_check_branch
        %405 = sbr.rel (%p403) target = $region52
      $region51: #{tpu_custom_call.1} parent=5 // pred_region
        %s406 = ssub.s32 %s19, 2
        // Predicated region
        $region53: #{tpu_custom_call.1} parent=51 // pred_check
          %p407 = pneg %p137
        $region54: #{tpu_custom_call.1} parent=51 // pred_check_branch
          %409 = sbr.rel (%p407) target = $region56
        $region55: #{tpu_custom_call.1} parent=51 // pred_region
          %s410 = sand.u32 %s122, 1
          %s411 = scalar_lea.sflag [#allocation3], %s410
          %s412 = sand.u32 %s122, 1
          %s413 = scalar_lea.vmem [#allocation5], %s412
          %414 = dma.done %s411, 16
        $region56: #{tpu_custom_call.1} parent=51 // pred_fallthru
          _
        // Predicated region
        $region57: #{tpu_custom_call.1} parent=51 // pred_check
          %p415 = pneg %p163
        $region58: #{tpu_custom_call.1} parent=51 // pred_check_branch
          %417 = sbr.rel (%p415) target = $region60
        $region59: #{tpu_custom_call.1} parent=51 // pred_region
          %s418 = sand.u32 %s148, 1
          %s419 = scalar_lea.sflag [#allocation7], %s418
          %s420 = sand.u32 %s148, 1
          %s421 = scalar_lea.vmem [#allocation6], %s420
          %422 = dma.done %s419, 16
        $region60: #{tpu_custom_call.1} parent=51 // pred_fallthru
          _
      $region52: #{tpu_custom_call.1} parent=5 // pred_fallthru
        _
    $region6: #{tpu_custom_call.1} parent=1 // loop_footer
      %s23 = sadd.s32 1, %s19
    $region7: #{tpu_custom_call.1} parent=1 // loop_footer_branch
      %18 = sbr.rel target = $region3
    $region8: #{tpu_custom_call.1} parent=1 // loop_exit
      _
    %423 = vsyncpa [#allocation3], 1
    %s424 = scalar_lea.sflag [#allocation3], 1
    %425 = vsyncpa %s424, 1
    %426 = vsyncpa [#allocation7], 1
    %s427 = scalar_lea.sflag [#allocation7], 1
    %428 = vsyncpa %s427, 1
    %429 = vsyncpa [#allocation4], 1
    %s430 = scalar_lea.sflag [#allocation4], 1
    %431 = vsyncpa %s430, 1

</llo_original>
